<compile_context>
chip_gen: v5e
topology: v5e:2x2
jax: 0.10.0
libtpu: 0.0.40
codegen_flags: <defaults>
</compile_context>

<pallas_src>
import functools

import jax
import jax.numpy as jnp
from jax.experimental import pallas as pl
from jax.experimental.pallas import tpu as pltpu

EPS = 1e-9

_LANES = 128
_SUBLANES = 8
_ACC_ROWS = 32                        # 4 interleaved (8,128) accumulators
_ROW_Q = 32                           # row-tile quantum (covers f32/bf16/int8 packing)
_NUM_CORES = 2                        # leading "parallel" axis feeds v7x megacore;
                                      # harmless extra loop level on 1-TC chips
_TARGET_BLOCK_BYTES = 4 * 1024 * 1024
_PALLAS_MIN_ELEMS = 1 << 18           # below this, XLA fusion beats kernel dispatch


def _round_up(x, m):
    return ((x + m - 1) // m) * m


# ---------------------------------------------------------------------------
# batch_mean=True : lane-dense flat reduction with persistent accumulator
# ---------------------------------------------------------------------------
def _kl_sum_kernel(m_ref, v_ref, out_ref, acc_ref, *,
                   eps, n_last, total_blocks, needs_mask):
    c = pl.program_id(0)              # "parallel" core axis
    s = pl.program_id(1)              # "arbitrary" reduction axis
    steps = pl.num_programs(1)
    blk = c * steps + s
    tr = m_ref.shape[0]

    @pl.when(s == 0)
    def _():
        acc_ref[...] = jnp.zeros_like(acc_ref)

    m = m_ref[...].astype(jnp.float32)
    v = v_ref[...].astype(jnp.float32)
    # "+1" is folded into the finalize outside: sum(1 + x) = N + sum(x)
    elem = jnp.log(v + eps) - m * m - v

    def accumulate(e):
        # 4 independent (8,128) add chains (VPU only); cross-lane work deferred.
        acc_ref[...] += jnp.sum(
            e.reshape(tr // _ACC_ROWS, _ACC_ROWS, _LANES), axis=0)

    if needs_mask:
        # Full blocks: no masking work at all.
        @pl.when(blk < total_blocks - 1)
        def _():
            accumulate(elem)

        # Only the last real block masks its padded / partial tail.  The
        # jnp.where select also discards any NaN from garbage partial-block
        # data before it can reach the accumulator.
        @pl.when(blk == total_blocks - 1)
        def _():
            rid = jax.lax.broadcasted_iota(jnp.int32, (tr, _LANES), 0)
            lid = jax.lax.broadcasted_iota(jnp.int32, (tr, _LANES), 1)
            lidx = rid * _LANES + lid          # block-local index: no overflow
            accumulate(jnp.where(lidx < n_last, elem, 0.0))
    else:
        @pl.when(blk < total_blocks)           # skip overshoot blocks (if any)
        def _():
            accumulate(elem)

    @pl.when(s == steps - 1)
    def _():
        # Fold the 4 accumulator groups -> one (8,128) partial block per core.
        out_ref[...] = jnp.sum(
            acc_ref[...].reshape(_ACC_ROWS // _SUBLANES, _SUBLANES, _LANES),
            axis=0)


def _kl_batch_mean(mean, var, eps, *, target_block_bytes=_TARGET_BLOCK_BYTES):
    B, D = mean.shape
    n = B * D
    itemsize = jnp.dtype(mean.dtype).itemsize

    # Lane-dense flat slab.  Reshape is free when n % 128 == 0; otherwise pad
    # only the <128-element remainder (masked out in-kernel).
    m_flat = mean.reshape(-1)
    v_flat = var.reshape(-1)
    rem = n % _LANES
    if rem:
        # TODO(synk): this small pad still copies the inputs once; it only
        # triggers when (B*D) % 128 != 0.
        pad = _LANES - rem
        m_flat = jnp.pad(m_flat, (0, pad))
        v_flat = jnp.pad(v_flat, (0, pad), constant_values=1.0)
    rows = m_flat.shape[0] // _LANES
    m2d = m_flat.reshape(rows, _LANES)
    v2d = v_flat.reshape(rows, _LANES)

    # Dtype-aware row-tile: ~target_block_bytes per input block, multiple of
    # _ROW_Q rows (covers f32/bf16/int8 sublane packing and _ACC_ROWS).
    tr_cap = max(_ROW_Q,
                 (target_block_bytes // (_LANES * itemsize)) // _ROW_Q * _ROW_Q)
    tr = min(tr_cap, _round_up(pl.cdiv(rows, _NUM_CORES), _ROW_Q))
    total_blocks = pl.cdiv(rows, tr)
    steps = pl.cdiv(total_blocks, _NUM_CORES)

    needs_mask = (total_blocks * tr * _LANES) != n
    n_last = n - (total_blocks - 1) * tr * _LANES   # valid elems in last block

    # Clamp so overshoot blocks (when total_blocks is odd) stay in range; the
    # kernel skips their accumulation.
    def idx_map(c, s):
        return (jnp.minimum(c * steps + s, total_blocks - 1), 0)

    block_bytes = tr * _LANES * itemsize
    vmem_limit = max(32 << 20, 4 * block_bytes + (4 << 20))

    partials = pl.pallas_call(
        functools.partial(_kl_sum_kernel, eps=eps, n_last=n_last,
                          total_blocks=total_blocks, needs_mask=needs_mask),
        out_shape=jax.ShapeDtypeStruct((_NUM_CORES * _SUBLANES, _LANES),
                                       jnp.float32),
        grid_spec=pltpu.PrefetchScalarGridSpec(
            num_scalar_prefetch=0,
            grid=(_NUM_CORES, steps),
            in_specs=[
                pl.BlockSpec((tr, _LANES), idx_map),
                pl.BlockSpec((tr, _LANES), idx_map),
            ],
            out_specs=pl.BlockSpec((_SUBLANES, _LANES), lambda c, s: (c, 0)),
            scratch_shapes=[pltpu.VMEM((_ACC_ROWS, _LANES), jnp.float32)],
        ),
        compiler_params=pltpu.CompilerParams(
            dimension_semantics=("parallel", "arbitrary"),
            vmem_limit_bytes=vmem_limit),
    )(m2d, v2d)

    # Single deferred cross-lane reduction + folded "+1" + -0.5/B scale.
    total = jnp.sum(partials)
    return (-0.5 / B) * (jnp.float32(n) + total)


# ---------------------------------------------------------------------------
# batch_mean=False : per-sample losses, tiled over the batch (partial blocks)
# ---------------------------------------------------------------------------
def _kl_rows_kernel(m_ref, v_ref, o_ref, *, eps):
    m = m_ref[...].astype(jnp.float32)
    v = v_ref[...].astype(jnp.float32)
    d = m_ref.shape[1]
    elem = jnp.log(v + eps) - m * m - v
    # +1 per column folded as +D; rows beyond B (partial block) are discarded
    # by the partial-block writeback.
    o_ref[...] = -0.5 * (jnp.float32(d)
                         + jnp.sum(elem, axis=1, keepdims=True))


def _kl_per_sample(mean, var, eps):
    B, D = mean.shape
    itemsize = jnp.dtype(mean.dtype).itemsize
    sub_q = max(_SUBLANES, 32 // itemsize)          # 8 f32 / 16 bf16 / 32 int8

    # VMEM footprint is lane-padded: size the batch tile on round_up(D, 128).
    row_bytes = _round_up(D, _LANES) * itemsize
    tb_cap = max(sub_q,
                 (_TARGET_BLOCK_BYTES // row_bytes) // sub_q * sub_q)
    tb = B if B <= tb_cap else tb_cap               # block==full dims is legal
    vmem_limit = max(32 << 20, 4 * tb * row_bytes + (4 << 20))

    # TODO(synk): for D << 128 and a hot per-sample path, a lane-dense layout
    # (samples along lanes) would recover vreg occupancy and unmasked stores;
    # output traffic here is tiny so the (tb, 1) store is not the bottleneck.
    out = pl.pallas_call(
        functools.partial(_kl_rows_kernel, eps=eps),
        out_shape=jax.ShapeDtypeStruct((B, 1), jnp.float32),
        grid_spec=pltpu.PrefetchScalarGridSpec(
            num_scalar_prefetch=0,
            grid=(pl.cdiv(B, tb),),
            in_specs=[
                pl.BlockSpec((tb, D), lambda i: (i, 0)),
                pl.BlockSpec((tb, D), lambda i: (i, 0)),
            ],
            out_specs=pl.BlockSpec((tb, 1), lambda i: (i, 0)),
        ),
        compiler_params=pltpu.CompilerParams(
            dimension_semantics=("parallel",),
            vmem_limit_bytes=vmem_limit),
    )(mean, var)
    return out[:, 0]


# ---------------------------------------------------------------------------
# Public entry point
# ---------------------------------------------------------------------------
def _kl_jax(mean, var, eps, batch_mean):
    loss = 1.0 + jnp.log(var.astype(jnp.float32) + eps) \
        - mean.astype(jnp.float32) ** 2 - var.astype(jnp.float32)
    loss = -0.5 * jnp.sum(loss, axis=1)
    if batch_mean:
        loss = jnp.mean(loss, axis=0)
    return loss


def kl_divergence(mean, var, eps=EPS, batch_mean=True, *, force_pallas=False):
    """Pallas TPU KL divergence. mean, var: (B, D). Returns scalar f32
    (batch_mean=True) or (B,) per-sample losses (batch_mean=False)."""
    B, D = mean.shape
    if not force_pallas and B * D < _PALLAS_MIN_ELEMS:
        return _kl_jax(mean, var, eps, batch_mean)   # dispatch beats kernel here
    if batch_mean:
        return _kl_batch_mean(mean, var, eps)
    return _kl_per_sample(mean, var, eps)


def _reference(mean, var, batch_mean=True):
    return _kl_jax(mean, var, EPS, batch_mean)


if __name__ == "__main__":
    key = jax.random.PRNGKey(0)
    k1, k2 = jax.random.split(key)

    def make(b, d, dtype=jnp.float32):
        m = jax.random.normal(k1, (b, d), dtype=jnp.float32)
        v = jax.nn.softplus(jax.random.normal(k2, (b, d), dtype=jnp.float32)) + 0.1
        return m.astype(dtype), v.astype(dtype)

    # 1) module-typical small shape, Pallas path forced.
    mean, var = make(8, 32)
    out = jax.block_until_ready(kl_divergence(mean, var, force_pallas=True))
    ref = _reference(mean, var, True)
    assert jnp.allclose(out, ref, rtol=1e-5, atol=1e-5), (out, ref)

    rows = jax.block_until_ready(
        kl_divergence(mean, var, batch_mean=False, force_pallas=True))
    rows_ref = _reference(mean, var, False)
    assert jnp.allclose(rows, rows_ref, rtol=1e-5, atol=1e-5), (rows, rows_ref)

    # 2) odd shape: exercises the <128-element pad + masked partial block.
    m2, v2 = make(6, 20)
    out2 = jax.block_until_ready(kl_divergence(m2, v2, force_pallas=True))
    assert jnp.allclose(out2, _reference(m2, v2, True), rtol=1e-5, atol=1e-5)
    rows2 = jax.block_until_ready(
        kl_divergence(m2, v2, batch_mean=False, force_pallas=True))
    assert jnp.allclose(rows2, _reference(m2, v2, False), rtol=1e-5, atol=1e-5)

    # 3) multi-step accumulation path (small block override forces steps > 1).
    m3, v3 = make(256, 512)
    out3 = jax.block_until_ready(
        _kl_batch_mean(m3, v3, EPS, target_block_bytes=64 * 1024))
    assert jnp.allclose(out3, _reference(m3, v3, True), rtol=2e-4, atol=2e-4)

    # 4) bf16 inputs (dtype-aware tiling; accumulation stays f32).
    m4, v4 = make(32, 256, dtype=jnp.bfloat16)
    out4 = jax.block_until_ready(kl_divergence(m4, v4, force_pallas=True))
    assert jnp.allclose(out4, _reference(m4, v4, True), rtol=1e-3, atol=1e-3)

    # 5) default auto path (small input -> pure-JAX fallback).
    out5 = jax.block_until_ready(kl_divergence(mean, var))
    assert jnp.allclose(out5, ref, rtol=1e-5, atol=1e-5)

    print("KERNEL_OK")
</pallas_src>

<mosaic_0001>
module attributes {stable_mosaic.version = 11 : i64} {
  func.func @_kl_sum_kernel(%arg0: i32, %arg1: i32, %arg2: memref<32x128xf32, #tpu.memory_space<vmem>>, %arg3: memref<32x128xf32, #tpu.memory_space<vmem>>, %arg4: memref<8x128xf32, #tpu.memory_space<vmem>>, %arg5: memref<32x128xf32, #tpu.memory_space<vmem>>) attributes {dimension_semantics = [#tpu.dimension_semantics<parallel>, #tpu.dimension_semantics<arbitrary>], iteration_bounds = array<i64: 2, 1>, scalar_prefetch = 0 : i64, scratch_operands = 1 : i64, tpu.core_type = #tpu.core_type<tc>, window_params = [{transform_indices = @transform_0, window_bounds = array<i64: 32, 128>}, {transform_indices = @transform_1, window_bounds = array<i64: 32, 128>}, {transform_indices = @transform_2, window_bounds = array<i64: 8, 128>}]} {
    %c1_i32 = arith.constant 1 : i32
    %0 = arith.muli %arg0, %c1_i32 : i32
    %1 = arith.addi %0, %arg1 : i32
    %c0_i32 = arith.constant 0 : i32
    %2 = arith.cmpi eq, %arg1, %c0_i32 : i32
    %3 = arith.extui %2 : i1 to i32
    %c0_i32_0 = arith.constant 0 : i32
    %4 = arith.cmpi ne, %3, %c0_i32_0 : i32
    scf.if %4 {
      %cst_10 = arith.constant 0.000000e+00 : f32
      %22 = vector.broadcast %cst_10 : f32 to vector<32x128xf32>
      %c0_11 = arith.constant 0 : index
      %c0_12 = arith.constant 0 : index
      %23 = vector.load %arg5[%c0_11, %c0_12] : memref<32x128xf32, #tpu.memory_space<vmem>>, vector<32x128xf32>
      tpu.vector_store %arg5[%c0_11, %c0_12], %22 {strides = array<i32>} : memref<32x128xf32, #tpu.memory_space<vmem>>, vector<32x128xf32>,
    } else {
    }
    %c0 = arith.constant 0 : index
    %c0_1 = arith.constant 0 : index
    %5 = vector.load %arg2[%c0, %c0_1] : memref<32x128xf32, #tpu.memory_space<vmem>>, vector<32x128xf32>
    %c0_2 = arith.constant 0 : index
    %c0_3 = arith.constant 0 : index
    %6 = vector.load %arg3[%c0_2, %c0_3] : memref<32x128xf32, #tpu.memory_space<vmem>>, vector<32x128xf32>
    %cst = arith.constant 9.99999971E-10 : f32
    %7 = vector.broadcast %cst : f32 to vector<32x128xf32>
    %8 = arith.addf %6, %7 : vector<32x128xf32>
    %9 = math.log %8 : vector<32x128xf32>
    %10 = arith.mulf %5, %5 : vector<32x128xf32>
    %11 = arith.subf %9, %10 : vector<32x128xf32>
    %12 = arith.subf %11, %6 : vector<32x128xf32>
    %c0_i32_4 = arith.constant 0 : i32
    %13 = arith.cmpi slt, %1, %c0_i32_4 : i32
    %14 = arith.extui %13 : i1 to i32
    %c0_i32_5 = arith.constant 0 : i32
    %15 = arith.cmpi ne, %14, %c0_i32_5 : i32
    scf.if %15 {
      %c0_10 = arith.constant 0 : index
      %c0_11 = arith.constant 0 : index
      %22 = vector.load %arg5[%c0_10, %c0_11] : memref<32x128xf32, #tpu.memory_space<vmem>>, vector<32x128xf32>
      %23 = vector.shape_cast %12 : vector<32x128xf32> to vector<1x32x128xf32>
      %cst_12 = arith.constant dense<0.000000e+00> : vector<32x128xf32>
      %24 = vector.multi_reduction <add>, %23, %cst_12 [0] : vector<1x32x128xf32> to vector<32x128xf32>
      %25 = arith.addf %22, %24 : vector<32x128xf32>
      %c0_13 = arith.constant 0 : index
      %c0_14 = arith.constant 0 : index
      %26 = vector.load %arg5[%c0_13, %c0_14] : memref<32x128xf32, #tpu.memory_space<vmem>>, vector<32x128xf32>
      tpu.vector_store %arg5[%c0_13, %c0_14], %25 {strides = array<i32>} : memref<32x128xf32, #tpu.memory_space<vmem>>, vector<32x128xf32>,
    } else {
    }
    %c0_i32_6 = arith.constant 0 : i32
    %16 = arith.cmpi eq, %1, %c0_i32_6 : i32
    %17 = arith.extui %16 : i1 to i32
    %c0_i32_7 = arith.constant 0 : i32
    %18 = arith.cmpi ne, %17, %c0_i32_7 : i32
    scf.if %18 {
      %22 = tpu.iota {dimensions = array<i32: 0>} : vector<32x128xi32>
      %23 = tpu.iota {dimensions = array<i32: 1>} : vector<32x128xi32>
      %c128_i32 = arith.constant 128 : i32
      %24 = vector.broadcast %c128_i32 : i32 to vector<32x128xi32>
      %25 = arith.muli %22, %24 : vector<32x128xi32>
      %26 = arith.addi %25, %23 : vector<32x128xi32>
      %c256_i32 = arith.constant 256 : i32
      %27 = vector.broadcast %c256_i32 : i32 to vector<32x128xi32>
      %28 = arith.cmpi slt, %26, %27 : vector<32x128xi32>
      %cst_10 = arith.constant 0.000000e+00 : f32
      %29 = vector.broadcast %cst_10 : f32 to vector<32x128xf32>
      %30 = arith.select %28, %12, %29 : vector<32x128xi1>, vector<32x128xf32>
      %c0_11 = arith.constant 0 : index
      %c0_12 = arith.constant 0 : index
      %31 = vector.load %arg5[%c0_11, %c0_12] : memref<32x128xf32, #tpu.memory_space<vmem>>, vector<32x128xf32>
      %32 = vector.shape_cast %30 : vector<32x128xf32> to vector<1x32x128xf32>
      %cst_13 = arith.constant dense<0.000000e+00> : vector<32x128xf32>
      %33 = vector.multi_reduction <add>, %32, %cst_13 [0] : vector<1x32x128xf32> to vector<32x128xf32>
      %34 = arith.addf %31, %33 : vector<32x128xf32>
      %c0_14 = arith.constant 0 : index
      %c0_15 = arith.constant 0 : index
      %35 = vector.load %arg5[%c0_14, %c0_15] : memref<32x128xf32, #tpu.memory_space<vmem>>, vector<32x128xf32>
      tpu.vector_store %arg5[%c0_14, %c0_15], %34 {strides = array<i32>} : memref<32x128xf32, #tpu.memory_space<vmem>>, vector<32x128xf32>,
    } else {
    }
    %c0_i32_8 = arith.constant 0 : i32
    %19 = arith.cmpi eq, %arg1, %c0_i32_8 : i32
    %20 = arith.extui %19 : i1 to i32
    %c0_i32_9 = arith.constant 0 : i32
    %21 = arith.cmpi ne, %20, %c0_i32_9 : i32
    scf.if %21 {
      %c0_10 = arith.constant 0 : index
      %c0_11 = arith.constant 0 : index
      %22 = vector.load %arg5[%c0_10, %c0_11] : memref<32x128xf32, #tpu.memory_space<vmem>>, vector<32x128xf32>
      %23 = vector.shape_cast %22 : vector<32x128xf32> to vector<4x8x128xf32>
      %cst_12 = arith.constant dense<0.000000e+00> : vector<8x128xf32>
      %24 = vector.multi_reduction <add>, %23, %cst_12 [0] : vector<4x8x128xf32> to vector<8x128xf32>
      %c0_13 = arith.constant 0 : index
      %c0_14 = arith.constant 0 : index
      %25 = vector.load %arg4[%c0_13, %c0_14] : memref<8x128xf32, #tpu.memory_space<vmem>>, vector<8x128xf32>
      tpu.vector_store %arg4[%c0_13, %c0_14], %24 {strides = array<i32>} : memref<8x128xf32, #tpu.memory_space<vmem>>, vector<8x128xf32>,
    } else {
    }
    return
  }
  func.func @transform_0(%arg0: i32, %arg1: i32) -> (i32, i32) {
    %c1_i32 = arith.constant 1 : i32
    %0 = arith.muli %arg0, %c1_i32 : i32
    %1 = arith.addi %0, %arg1 : i32
    %c0_i32 = arith.constant 0 : i32
    %2 = arith.minsi %1, %c0_i32 : i32
    %c0_i32_0 = arith.constant 0 : i32
    %c0_i32_1 = arith.constant 0 : i32
    return %2, %c0_i32_0 : i32, i32
  }
  func.func @transform_1(%arg0: i32, %arg1: i32) -> (i32, i32) {
    %c1_i32 = arith.constant 1 : i32
    %0 = arith.muli %arg0, %c1_i32 : i32
    %1 = arith.addi %0, %arg1 : i32
    %c0_i32 = arith.constant 0 : i32
    %2 = arith.minsi %1, %c0_i32 : i32
    %c0_i32_0 = arith.constant 0 : i32
    %c0_i32_1 = arith.constant 0 : i32
    return %2, %c0_i32_0 : i32, i32
  }
  func.func @transform_2(%arg0: i32, %arg1: i32) -> (i32, i32) {
    %c0_i32 = arith.constant 0 : i32
    %c0_i32_0 = arith.constant 0 : i32
    return %arg0, %c0_i32 : i32, i32
  }
}

</mosaic_0001>

<llo_original>
// kernel: tpu_custom_call.1
$region0: #{tpu_custom_call.1}
  #allocation0 [shape = 'u32[]', space=smem, size = 0x4, offset = 0x4, fixed_abs, tag = 'smem constant byte address 0x4 - core index']
  #allocation1 [shape = 'u32[72,128]{1,0:T(1,128)}', space=vmem, size = 0x9000, scoped, tag = 'internal scratch']
  #allocation2 [shape = 'f32[32,128]{1,0:T(8,128)}', space=vmem, size = 0x4000, scoped, tag = 'scratch operand']
  %s0 = inlined_call_operand.hbm [shape: f32[2,128], index: 0, kind: input, shape index: {}]
  %s1 = inlined_call_operand.hbm [shape: f32[2,128], index: 1, kind: input, shape index: {}]
  %s2 = inlined_call_operand.hbm [shape: f32[16,128], index: 2, kind: output, shape index: {}]
  %s3 = sld [smem:[#allocation0]]
  $region65: #{tpu_custom_call.1} parent=0
    _
  %s5 = ssub.s32 1, %s3
  %s6 = scalar_select 0, %s5, %s3
  $region1: #{tpu_custom_call.1} parent=0
    #allocation3 [shape = 'u8[32768]{0}', space=vmem, size = 0x8000, scoped, tag = 'input window, operand 0']
    #allocation4 [shape = 's32[2]{0}', space=sflag, size = 0x8, scoped, tag = 'scoped memory for tpu_custom_call.1']
    #allocation5 [shape = 's32[2]{0}', space=sflag, size = 0x8, scoped, tag = 'scoped memory for tpu_custom_call.1']
    #allocation6 [shape = 'u8[32768]{0}', space=vmem, size = 0x8000, scoped, tag = 'input window, operand 1']
    #allocation7 [shape = 's32[2]{0}', space=sflag, size = 0x8, scoped, tag = 'scoped memory for tpu_custom_call.1']
    #allocation8 [shape = 'u8[8192]{0}', space=vmem, size = 0x2000, scoped, tag = 'output window, operand 0']
    %7 = vsyncpa [#allocation4], 0
    %s8 = scalar_lea.sflag [#allocation4], 1
    %9 = vsyncpa %s8, 0
    %10 = vsyncpa [#allocation7], 0
    %s11 = scalar_lea.sflag [#allocation7], 1
    %12 = vsyncpa %s11, 0
    %13 = vsyncpa [#allocation5], 0
    %s14 = scalar_lea.sflag [#allocation5], 1
    %15 = vsyncpa %s14, 0
    loop: start=0, step=1, limit=4
    $region2: #{tpu_custom_call.1} parent=1 // loop_pre_header
      _
    $region3: #{tpu_custom_call.1} parent=1 // loop_header
      %s17 = sphi 0, %s21
      %p18 = scmp.ge.s32.totalorder %s17, 4
      %s24 = sphi 0, %s36
      %s25 = sphi 0, %s32
      %s26 = sphi 0, %s24
      %s27 = sphi 0, %s25
      %s28 = sphi 0, %s26
      %s29 = sphi 0, %s27
      %s45 = sphi 0, %s47
      %s48 = sphi 0, %s45
      %s49 = sphi 0, %s48
      %s65 = sphi 0, %s49
      %s77 = sphi 0, %s79
      %s80 = sphi 0, %s77
      %s81 = sphi 0, %s80
      %s97 = sphi 0, %s81
      %s103 = sphi 0, %s105
      %s106 = sphi 0, %s103
      %s107 = sphi 0, %s106
      %s123 = sphi 0, %s107
    $region4: #{tpu_custom_call.1} parent=1 // loop_header_branch
      %20 = sbr.rel (%p18) target = $region8
    $region5: #{tpu_custom_call.1} parent=1 // loop_body
      %s22 = ssub.s32 %s17, 1
      %s23 = ssub.s32 %s17, 2
      %s30 = sadd.s32 1, %s25
      %p31 = scmp.ge.s32.totalorder %s30, 1
      %s32 = scalar_select %p31, 0, %s30
      %s33 = sadd.s32 1, %s24
      %s34 = scalar_select %p31, %s33, %s24
      %p35 = scmp.ge.s32.totalorder %s34, 2
      %s36 = scalar_select %p35, 0, %s34
      %s37 = sadd.s32 %s24, %s25
      %p38 = scmp.lt.s32.totalorder %s37, 0
      %s39 = scalar_select %p38, %s37, 0
      %s40 = sadd.s32 %s36, %s32
      %p41 = scmp.lt.s32.totalorder %s40, 0
      %s42 = scalar_select %p41, %s40, 0
      %s43 = ssub.s32 %s39, %s42
      %p44 = scmp.eq.s32.totalorder %s43, 0
      %s46 = sadd.s32 %s45, 1
      %s47 = scalar_select %p44, %s45, %s46
      %p50 = pneg %p44
      %p51 = scmp.eq.s32.totalorder %s17, 1
      %p52 = por %p50, %p51
      %p53 = scmp.ne.s32.totalorder %s45, %s48
      %p54 = scmp.eq.s32.totalorder %s17, 0
      %p55 = por %p53, %p54
      %p56 = scmp.ne.s32.totalorder %s45, %s48
      %p57 = scmp.eq.s32.totalorder %s22, 1
      %p58 = por %p56, %p57
      %p59 = scmp.ne.s32.totalorder %s48, %s49
      %p60 = scmp.eq.s32.totalorder %s22, 0
      %p61 = por %p59, %p60
      %p62 = scmp.ne.s32.totalorder %s48, %s49
      %p63 = scmp.eq.s32.totalorder %s23, 1
      %p64 = por %p62, %p63
      %p66 = scmp.ne.s32.totalorder %s49, %s65
      %p67 = scmp.eq.s32.totalorder %s23, 0
      %p68 = por %p66, %p67
      %s69 = sadd.s32 %s24, %s25
      %p70 = scmp.lt.s32.totalorder %s69, 0
      %s71 = scalar_select %p70, %s69, 0
      %s72 = sadd.s32 %s36, %s32
      %p73 = scmp.lt.s32.totalorder %s72, 0
      %s74 = scalar_select %p73, %s72, 0
      %s75 = ssub.s32 %s71, %s74
      %p76 = scmp.eq.s32.totalorder %s75, 0
      %s78 = sadd.s32 %s77, 1
      %s79 = scalar_select %p76, %s77, %s78
      %p82 = pneg %p76
      %p83 = scmp.eq.s32.totalorder %s17, 1
      %p84 = por %p82, %p83
      %p85 = scmp.ne.s32.totalorder %s77, %s80
      %p86 = scmp.eq.s32.totalorder %s17, 0
      %p87 = por %p85, %p86
      %p88 = scmp.ne.s32.totalorder %s77, %s80
      %p89 = scmp.eq.s32.totalorder %s22, 1
      %p90 = por %p88, %p89
      %p91 = scmp.ne.s32.totalorder %s80, %s81
      %p92 = scmp.eq.s32.totalorder %s22, 0
      %p93 = por %p91, %p92
      %p94 = scmp.ne.s32.totalorder %s80, %s81
      %p95 = scmp.eq.s32.totalorder %s23, 1
      %p96 = por %p94, %p95
      %p98 = scmp.ne.s32.totalorder %s81, %s97
      %p99 = scmp.eq.s32.totalorder %s23, 0
      %p100 = por %p98, %p99
      %s101 = ssub.s32 %s24, %s36
      %p102 = scmp.eq.s32.totalorder %s101, 0
      %s104 = sadd.s32 %s103, 1
      %s105 = scalar_select %p102, %s103, %s104
      %p108 = pneg %p102
      %p109 = scmp.eq.s32.totalorder %s17, 1
      %p110 = por %p108, %p109
      %p111 = scmp.ne.s32.totalorder %s103, %s106
      %p112 = scmp.eq.s32.totalorder %s17, 0
      %p113 = por %p111, %p112
      %p114 = scmp.ne.s32.totalorder %s103, %s106
      %p115 = scmp.eq.s32.totalorder %s22, 1
      %p116 = por %p114, %p115
      %p117 = scmp.ne.s32.totalorder %s106, %s107
      %p118 = scmp.eq.s32.totalorder %s22, 0
      %p119 = por %p117, %p118
      %p120 = scmp.ne.s32.totalorder %s106, %s107
      %p121 = scmp.eq.s32.totalorder %s23, 1
      %p122 = por %p120, %p121
      %p124 = scmp.ne.s32.totalorder %s107, %s123
      %p125 = scmp.eq.s32.totalorder %s23, 0
      %p126 = por %p124, %p125
      %p127 = scmp.le.s32.totalorder 1, %s17
      %p128 = scmp.lt.s32.totalorder %s17, 3
      %p129 = pnand %p127, %p128
      %p130 = pneg %p129
      // Predicated region
      $region9: #{tpu_custom_call.1} parent=5 // pred_check
        _
      $region10: #{tpu_custom_call.1} parent=5 // pred_check_branch
        %132 = sbr.rel (%p129) target = $region12
      $region11: #{tpu_custom_call.1} parent=5 // pred_region
        %s133 = ssub.s32 %s17, 1
      $region12: #{tpu_custom_call.1} parent=5 // pred_fallthru
        _
      %p134 = scmp.lt.s32.totalorder %s17, 2
      // Predicated region
      $region13: #{tpu_custom_call.1} parent=5 // pred_check
        %p135 = pneg %p134
      $region14: #{tpu_custom_call.1} parent=5 // pred_check_branch
        %137 = sbr.rel (%p135) target = $region16
      $region15: #{tpu_custom_call.1} parent=5 // pred_region
        // Predicated region
        $region17: #{tpu_custom_call.1} parent=15 // pred_check
          %p138 = pneg %p55
        $region18: #{tpu_custom_call.1} parent=15 // pred_check_branch
          %140 = sbr.rel (%p138) target = $region20
        $region19: #{tpu_custom_call.1} parent=15 // pred_region
          %s141 = sand.u32 %s45, 1
          %s142 = scalar_lea.sflag [#allocation4], %s141
          %s143 = sand.u32 %s45, 1
          %s144 = smul.addr %s143, 32
          %s145 = scalar_lea.vmem [#allocation3], %s144
          %s146 = sadd.s32 %s24, %s25
          %p147 = scmp.lt.s32.totalorder %s146, 0
          %s148 = scalar_select %p147, %s146, 0
          %s149 = smul.u32 16, %s148
          %s150 = ssub.s32 1, %s149
          %s151 = smul.u32 2, %s150
          %s152 = ssub.s32 32, %s151
          %s153 = sshll.u32 %s152, 4
          %154 = vsyncadd %s142, %s153
          %p155 = scmp.ne.s32.totalorder 0, %s151
          %s156 = smul.addr %s149, 2
          %s157 = scalar_lea.hbm %s0, %s156
          %s158 = smul.u32 2, %s150
          %s159 = sshll.u32 %s157, 4
          %s160 = int_to_ptr.hbm [resolvable:$true] %s159
          %s161 = sshll.u32 %s145, 4
          %s162 = int_to_ptr.vmem [resolvable:$true] %s161
          %s163 = sshll.u32 %s158, 4
          %167 = dma.hbm_to_vmem [thread:$0]  (%p155), %s160, %s163, %s162, %s142, 32, 32, 2
        $region20: #{tpu_custom_call.1} parent=15 // pred_fallthru
          _
        // Predicated region
        $region21: #{tpu_custom_call.1} parent=15 // pred_check
          %p168 = pneg %p87
        $region22: #{tpu_custom_call.1} parent=15 // pred_check_branch
          %170 = sbr.rel (%p168) target = $region24
        $region23: #{tpu_custom_call.1} parent=15 // pred_region
          %s171 = sand.u32 %s77, 1
          %s172 = scalar_lea.sflag [#allocation7], %s171
          %s173 = sand.u32 %s77, 1
          %s174 = smul.addr %s173, 32
          %s175 = scalar_lea.vmem [#allocation6], %s174
          %s176 = sadd.s32 %s24, %s25
          %p177 = scmp.lt.s32.totalorder %s176, 0
          %s178 = scalar_select %p177, %s176, 0
          %s179 = smul.u32 16, %s178
          %s180 = ssub.s32 1, %s179
          %s181 = smul.u32 2, %s180
          %s182 = ssub.s32 32, %s181
          %s183 = sshll.u32 %s182, 4
          %184 = vsyncadd %s172, %s183
          %p185 = scmp.ne.s32.totalorder 0, %s181
          %s186 = smul.addr %s179, 2
          %s187 = scalar_lea.hbm %s1, %s186
          %s188 = smul.u32 2, %s180
          %s189 = sshll.u32 %s187, 4
          %s190 = int_to_ptr.hbm [resolvable:$true] %s189
          %s191 = sshll.u32 %s175, 4
          %s192 = int_to_ptr.vmem [resolvable:$true] %s191
          %s193 = sshll.u32 %s188, 4
          %197 = dma.hbm_to_vmem [thread:$0]  (%p185), %s190, %s193, %s192, %s172, 32, 32, 2
        $region24: #{tpu_custom_call.1} parent=15 // pred_fallthru
          _
      $region16: #{tpu_custom_call.1} parent=5 // pred_fallthru
        _
      %p198 = scmp.le.s32.totalorder 1, %s17
      %p199 = scmp.lt.s32.totalorder %s17, 3
      %p200 = pnand %p198, %p199
      %p201 = pneg %p200
      // Predicated region
      $region25: #{tpu_custom_call.1} parent=5 // pred_check
        _
      $region26: #{tpu_custom_call.1} parent=5 // pred_check_branch
        %203 = sbr.rel (%p200) target = $region28
      $region27: #{tpu_custom_call.1} parent=5 // pred_region
        %s204 = ssub.s32 %s17, 1
        %s205 = sand.u32 %s48, 1
        %s206 = scalar_lea.sflag [#allocation4], %s205
        %s207 = sand.u32 %s48, 1
        %s208 = smul.addr %s207, 32
        %s209 = scalar_lea.vmem [#allocation3], %s208
        // Predicated region
        $region29: #{tpu_custom_call.1} parent=27 // pred_check
          %p210 = pneg %p61
        $region30: #{tpu_custom_call.1} parent=27 // pred_check_branch
          %212 = sbr.rel (%p210) target = $region32
        $region31: #{tpu_custom_call.1} parent=27 // pred_region
          %214 = dma.done %s206, 512
        $region32: #{tpu_custom_call.1} parent=27 // pred_fallthru
          _
        %s215 = sand.u32 %s80, 1
        %s216 = scalar_lea.sflag [#allocation7], %s215
        %s217 = sand.u32 %s80, 1
        %s218 = smul.addr %s217, 32
        %s219 = scalar_lea.vmem [#allocation6], %s218
        // Predicated region
        $region33: #{tpu_custom_call.1} parent=27 // pred_check
          %p220 = pneg %p93
        $region34: #{tpu_custom_call.1} parent=27 // pred_check_branch
          %222 = sbr.rel (%p220) target = $region36
        $region35: #{tpu_custom_call.1} parent=27 // pred_region
          %224 = dma.done %s216, 512
        $region36: #{tpu_custom_call.1} parent=27 // pred_fallthru
          _
        %s225 = sand.u32 %s48, 1
        %s226 = scalar_lea.sflag [#allocation4], %s225
        %s227 = sand.u32 %s48, 1
        %s228 = smul.addr %s227, 32
        %s229 = scalar_lea.vmem [#allocation3], %s228
        %p230 = pneg %p61
        %p231 = pneg %p58
        %s232 = sand.u32 %s80, 1
        %s233 = scalar_lea.sflag [#allocation7], %s232
        %s234 = sand.u32 %s80, 1
        %s235 = smul.addr %s234, 32
        %s236 = scalar_lea.vmem [#allocation6], %s235
        %p237 = pneg %p93
        %p238 = pneg %p90
        %p239 = pneg %p119
        %p240 = pneg %p116
        %s241 = sand.u32 %s106, 1
        %s242 = scalar_lea.sflag [#allocation5], %s241
        %s243 = sand.u32 %s106, 1
        %s244 = smul.addr %s243, 8
        %s245 = scalar_lea.vmem [#allocation8], %s244
        %s246 = sadd.s32 %s26, %s27
        %p247 = scmp.lt.s32.totalorder %s246, 0
        %s248 = scalar_select %p247, %s246, 0
        %s249 = smul.u32 16, %s248
        %s250 = ssub.s32 1, %s249
        %s251 = smul.u32 2, %s250
        %s252 = sadd.s32 %s26, %s27
        %p253 = scmp.lt.s32.totalorder %s252, 0
        %s254 = scalar_select %p253, %s252, 0
        %s255 = smul.u32 16, %s254
        %s256 = ssub.s32 1, %s255
        %s257 = smul.u32 2, %s256
        %s258 = sadd.s32 %s26, %s27
        %p259 = scmp.eq.s32.totalorder %s27, 0
        // Predicated region
        $region37: #{tpu_custom_call.1} parent=27 // pred_check
          %p260 = pneg %p259
        $region38: #{tpu_custom_call.1} parent=27 // pred_check_branch
          %262 = sbr.rel (%p260) target = $region40
        $region39: #{tpu_custom_call.1} parent=27 // pred_region
          %263 = vst [vmem:[#allocation2] sm:$0xff] 0.0
          %264 = vst [vmem:[#allocation2 + $0x8] sm:$0xff] 0.0
          %265 = vst [vmem:[#allocation2 + $0x10] sm:$0xff] 0.0
          %266 = vst [vmem:[#allocation2 + $0x18] sm:$0xff] 0.0
        $region40: #{tpu_custom_call.1} parent=27 // pred_fallthru
          _
        %v267 = vld [vmem:[%s209] sm:$0xff]
        %v268 = vld [vmem:[%s209 + $0x8] sm:$0xff]
        %v269 = vld [vmem:[%s209 + $0x10] sm:$0xff]
        %v270 = vld [vmem:[%s209 + $0x18] sm:$0xff]
        %v271 = vld [vmem:[%s219] sm:$0xff]
        %v272 = vld [vmem:[%s219 + $0x8] sm:$0xff]
        %v273 = vld [vmem:[%s219 + $0x10] sm:$0xff]
        %v274 = vld [vmem:[%s219 + $0x18] sm:$0xff]
        %v275 = vadd.f32 %v271, 1e-09
        %v276 = vadd.f32 %v272, 1e-09
        %v277 = vadd.f32 %v273, 1e-09
        %v278 = vadd.f32 %v274, 1e-09
        %v279 = vlog2.pop %v275
        %v280 = vmul.f32 %v279, 0.6931472
        %v281 = vlog2.pop %v276
        %v282 = vmul.f32 %v281, 0.6931472
        %v283 = vlog2.pop %v277
        %v284 = vmul.f32 %v283, 0.6931472
        %v285 = vlog2.pop %v278
        %v286 = vmul.f32 %v285, 0.6931472
        %v287 = vmul.f32 %v267, %v267
        %v288 = vmul.f32 %v268, %v268
        %v289 = vmul.f32 %v269, %v269
        %v290 = vmul.f32 %v270, %v270
        %v291 = vsub.f32 %v280, %v287
        %v292 = vsub.f32 %v282, %v288
        %v293 = vsub.f32 %v284, %v289
        %v294 = vsub.f32 %v286, %v290
        %v295 = vsub.f32 %v291, %v271
        %v296 = vsub.f32 %v292, %v272
        %v297 = vsub.f32 %v293, %v273
        %v298 = vsub.f32 %v294, %v274
        %p299 = scmp.lt.s32.totalorder %s258, 0
        // Predicated region
        $region41: #{tpu_custom_call.1} parent=27 // pred_check
          %p300 = pneg %p299
        $region42: #{tpu_custom_call.1} parent=27 // pred_check_branch
          %302 = sbr.rel (%p300) target = $region44
        $region43: #{tpu_custom_call.1} parent=27 // pred_region
          %v303 = vld [vmem:[#allocation2] sm:$0xff]
          %v304 = vld [vmem:[#allocation2 + $0x8] sm:$0xff]
          %v305 = vld [vmem:[#allocation2 + $0x10] sm:$0xff]
          %v306 = vld [vmem:[#allocation2 + $0x18] sm:$0xff]
          %v307 = vadd.f32 %v295, 0.0
          %v308 = vadd.f32 %v296, 0.0
          %v309 = vadd.f32 %v297, 0.0
          %v310 = vadd.f32 %v298, 0.0
          %v311 = vadd.f32 %v303, %v307
          %v312 = vadd.f32 %v304, %v308
          %v313 = vadd.f32 %v305, %v309
          %v314 = vadd.f32 %v306, %v310
          %315 = vst [vmem:[#allocation2] sm:$0xff] %v311
          %316 = vst [vmem:[#allocation2 + $0x8] sm:$0xff] %v312
          %317 = vst [vmem:[#allocation2 + $0x10] sm:$0xff] %v313
          %318 = vst [vmem:[#allocation2 + $0x18] sm:$0xff] %v314
        $region44: #{tpu_custom_call.1} parent=27 // pred_fallthru
          _
        %p319 = scmp.eq.s32.totalorder %s258, 0
        // Predicated region
        $region45: #{tpu_custom_call.1} parent=27 // pred_check
          %p320 = pneg %p319
        $region46: #{tpu_custom_call.1} parent=27 // pred_check_branch
          %322 = sbr.rel (%p320) target = $region48
        $region47: #{tpu_custom_call.1} parent=27 // pred_region
          %v323 = vlaneseq
          %v324 = vshrl.u32 %v323, 7
          %v325 = vadd.s32 %v324, 8
          %v326 = vadd.s32 %v324, 16
          %v327 = vadd.s32 %v324, 24
          %v328 = vlaneseq
          %v329 = vand.u32 %v328, 127
          %v330 = vmul.u32 %v324, 128
          %v331 = vmul.u32 %v325, 128
          %v332 = vmul.u32 %v326, 128
          %v333 = vmul.u32 %v327, 128
          %v334 = vadd.s32 %v330, %v329
          %v335 = vadd.s32 %v331, %v329
          %v336 = vadd.s32 %v332, %v329
          %v337 = vadd.s32 %v333, %v329
          %vm338 = vcmp.lt.s32.totalorder %v334, 256
          %vm339 = vcmp.lt.s32.totalorder %v335, 256
          %vm340 = vcmp.lt.s32.totalorder %v336, 256
          %vm341 = vcmp.lt.s32.totalorder %v337, 256
          %v342 = vsel %vm338, %v295, 0.0
          %v343 = vsel %vm339, %v296, 0.0
          %v344 = vsel %vm340, %v297, 0.0
          %v345 = vsel %vm341, %v298, 0.0
          %v346 = vld [vmem:[#allocation2] sm:$0xff]
          %v347 = vld [vmem:[#allocation2 + $0x8] sm:$0xff]
          %v348 = vld [vmem:[#allocation2 + $0x10] sm:$0xff]
          %v349 = vld [vmem:[#allocation2 + $0x18] sm:$0xff]
          %v350 = vadd.f32 %v342, 0.0
          %v351 = vadd.f32 %v343, 0.0
          %v352 = vadd.f32 %v344, 0.0
          %v353 = vadd.f32 %v345, 0.0
          %v354 = vadd.f32 %v346, %v350
          %v355 = vadd.f32 %v347, %v351
          %v356 = vadd.f32 %v348, %v352
          %v357 = vadd.f32 %v349, %v353
          %358 = vst [vmem:[#allocation2] sm:$0xff] %v354
          %359 = vst [vmem:[#allocation2 + $0x8] sm:$0xff] %v355
          %360 = vst [vmem:[#allocation2 + $0x10] sm:$0xff] %v356
          %361 = vst [vmem:[#allocation2 + $0x18] sm:$0xff] %v357
        $region48: #{tpu_custom_call.1} parent=27 // pred_fallthru
          _
        // Predicated region
        $region49: #{tpu_custom_call.1} parent=27 // pred_check
          %p362 = pneg %p259
        $region50: #{tpu_custom_call.1} parent=27 // pred_check_branch
          %364 = sbr.rel (%p362) target = $region52
        $region51: #{tpu_custom_call.1} parent=27 // pred_region
          %v365 = vld [vmem:[#allocation2] sm:$0xff]
          %v366 = vld [vmem:[#allocation2 + $0x8] sm:$0xff]
          %v367 = vld [vmem:[#allocation2 + $0x10] sm:$0xff]
          %v368 = vld [vmem:[#allocation2 + $0x18] sm:$0xff]
          %v369 = vadd.f32 %v365, %v366
          %v370 = vadd.f32 %v369, %v367
          %v371 = vadd.f32 %v370, %v368
          %372 = vst [vmem:[%s245] sm:$0xff] %v371
        $region52: #{tpu_custom_call.1} parent=27 // pred_fallthru
          _
        %s373 = sand.u32 %s106, 1
        %s374 = scalar_lea.sflag [#allocation5], %s373
        %s375 = sand.u32 %s106, 1
        %s376 = smul.addr %s375, 8
        %s377 = scalar_lea.vmem [#allocation8], %s376
        // Predicated region
        $region53: #{tpu_custom_call.1} parent=27 // pred_check
          %p378 = pneg %p116
        $region54: #{tpu_custom_call.1} parent=27 // pred_check_branch
          %380 = sbr.rel (%p378) target = $region56
        $region55: #{tpu_custom_call.1} parent=27 // pred_region
          %382 = vsyncadd %s374, 0
          %s383 = smul.addr %s26, 8
          %s384 = scalar_lea.hbm %s2, %s383
          %s386 = sshll.u32 %s377, 4
          %s387 = int_to_ptr.vmem [resolvable:$true] %s386
          %s388 = sshll.u32 %s384, 4
          %s389 = int_to_ptr.hbm [resolvable:$true] %s388
          %391 = dma.vmem_to_hbm [thread:$0]  %s387, 128, %s389, %s374
        $region56: #{tpu_custom_call.1} parent=27 // pred_fallthru
          _
      $region28: #{tpu_custom_call.1} parent=5 // pred_fallthru
        _
      %p392 = scmp.le.s32.totalorder 2, %s17
      // Predicated region
      $region57: #{tpu_custom_call.1} parent=5 // pred_check
        %p393 = pneg %p392
      $region58: #{tpu_custom_call.1} parent=5 // pred_check_branch
        %395 = sbr.rel (%p393) target = $region60
      $region59: #{tpu_custom_call.1} parent=5 // pred_region
        %s396 = ssub.s32 %s17, 2
        // Predicated region
        $region61: #{tpu_custom_call.1} parent=59 // pred_check
          %p397 = pneg %p122
        $region62: #{tpu_custom_call.1} parent=59 // pred_check_branch
          %399 = sbr.rel (%p397) target = $region64
        $region63: #{tpu_custom_call.1} parent=59 // pred_region
          %s400 = sand.u32 %s107, 1
          %s401 = scalar_lea.sflag [#allocation5], %s400
          %s402 = sand.u32 %s107, 1
          %s403 = smul.addr %s402, 8
          %s404 = scalar_lea.vmem [#allocation8], %s403
          %406 = dma.done %s401, 128
        $region64: #{tpu_custom_call.1} parent=59 // pred_fallthru
          _
      $region60: #{tpu_custom_call.1} parent=5 // pred_fallthru
        _
    $region6: #{tpu_custom_call.1} parent=1 // loop_footer
      %s21 = sadd.s32 1, %s17
    $region7: #{tpu_custom_call.1} parent=1 // loop_footer_branch
      %16 = sbr.rel target = $region3
    $region8: #{tpu_custom_call.1} parent=1 // loop_exit
      _
    %407 = vsyncpa [#allocation4], 1
    %s408 = scalar_lea.sflag [#allocation4], 1
    %409 = vsyncpa %s408, 1
    %410 = vsyncpa [#allocation7], 1
    %s411 = scalar_lea.sflag [#allocation7], 1
    %412 = vsyncpa %s411, 1
    %413 = vsyncpa [#allocation5], 1
    %s414 = scalar_lea.sflag [#allocation5], 1
    %415 = vsyncpa %s414, 1

</llo_original>
